<compile_context>
chip_gen: v7x
topology: tpu7x:2x2x1
jax: 0.10.0
libtpu: 0.0.40
codegen_flags: <defaults>
</compile_context>

<pallas_src>
import functools

import jax
import jax.numpy as jnp
from jax.experimental import pallas as pl
from jax.experimental.pallas import tpu as pltpu


def _ae_forward_kernel(x_ref, enc_w_ref, dec_w_ref, bias_ref, out_ref):
    # x_ref:     (n_feature, tile)      -- streamed per grid step
    # enc_w_ref: (n_latent,  n_feature) -- resident (constant index_map)
    # dec_w_ref: (n_feature, n_latent)  -- resident
    # bias_ref:  (n_feature, 1)         -- folded bias c = W_dec b_enc + b_dec (f32)
    # out_ref:   (n_feature, tile)
    z = jnp.dot(enc_w_ref[...], x_ref[...], preferred_element_type=jnp.float32)
    x_hat = jnp.dot(
        dec_w_ref[...],
        z.astype(dec_w_ref.dtype),
        preferred_element_type=jnp.float32,
    )
    out_ref[...] = (x_hat + bias_ref[...]).astype(out_ref.dtype)


def _round_up(x, m):
    return ((x + m - 1) // m) * m


def _choose_tile_and_vmem(n_feature, n_latent, n_samples, requested_tile, itemsize):
    """Pick a sample tile (multiple of 128) whose double-buffered footprint
    fits a cross-generation-safe VMEM budget, and a matching vmem limit."""
    tile = max(128, (int(requested_tile) // 128) * 128)
    # Never tile wider than the (128-padded) sample count (tiny-problem case).
    tile = min(tile, _round_up(max(n_samples, 1), 128))

    # Pallas double-buffers every BlockSpec, including the constant-index
    # weights and bias, so count them twice each.  Bias pads to 128 lanes.
    weight_bytes = (
        2 * 2 * (n_latent * n_feature * itemsize)   # enc_w + dec_w, 2 buffers each
        + 2 * (n_feature * 128 * 4)                 # folded bias (f32), 2 buffers
    )

    def stream_bytes(t):
        # x tile in + x_hat tile out, 2 buffers each
        return 2 * 2 * (n_feature * t * itemsize)

    budget = 48 * 1024 * 1024  # conservative vs v7x's 64 MiB physical VMEM
    while tile > 128 and weight_bytes + stream_bytes(tile) > budget:
        tile -= 128

    vmem_limit = weight_bytes + stream_bytes(tile) + (4 << 20)  # + headroom
    vmem_limit = int(min(max(vmem_limit, 32 << 20), 56 << 20))
    return tile, vmem_limit


@functools.partial(jax.jit, static_argnames=("tile_samples",))
def autoencoder_forward(x, enc_w, enc_b, dec_w, dec_b, *, tile_samples=1024):
    """Fused linear-autoencoder forward pass: decode(encode(x)).

    Args:
      x:     (n_feature, n_samples)
      enc_w: (n_latent,  n_feature)
      enc_b: (n_latent,)
      dec_w: (n_feature, n_latent)
      dec_b: (n_feature,)
    Returns:
      x_hat: (n_feature, n_samples), same dtype as x.
    """
    n_feature, n_samples = x.shape
    n_latent = enc_w.shape[0]
    itemsize = jnp.dtype(x.dtype).itemsize

    # Fold both affine biases into one output-bias vector (f32):
    #   W_dec (W_enc x + b_enc) + b_dec = W_dec W_enc x + (W_dec b_enc + b_dec)
    bias = (
        dec_w.astype(jnp.float32) @ enc_b.astype(jnp.float32)
        + dec_b.astype(jnp.float32)
    ).reshape(n_feature, 1)

    tile, vmem_limit = _choose_tile_and_vmem(
        n_feature, n_latent, n_samples, tile_samples, itemsize
    )

    # Pad the sample axis so the grid tiles it exactly (ragged inputs allowed).
    n_padded = _round_up(n_samples, tile)
    if n_padded != n_samples:
        x_p = jnp.pad(x, ((0, 0), (0, n_padded - n_samples)))
    else:
        x_p = x

    grid = (n_padded // tile,)

    out = pl.pallas_call(
        _ae_forward_kernel,
        out_shape=jax.ShapeDtypeStruct((n_feature, n_padded), x.dtype),
        grid_spec=pltpu.PrefetchScalarGridSpec(
            num_scalar_prefetch=0,
            grid=grid,
            in_specs=[
                pl.BlockSpec((n_feature, tile), lambda i: (0, i)),      # x (streamed)
                pl.BlockSpec((n_latent, n_feature), lambda i: (0, 0)),  # enc_w (resident)
                pl.BlockSpec((n_feature, n_latent), lambda i: (0, 0)),  # dec_w (resident)
                pl.BlockSpec((n_feature, 1), lambda i: (0, 0)),         # folded bias
            ],
            out_specs=pl.BlockSpec((n_feature, tile), lambda i: (0, i)),
        ),
        compiler_params=pltpu.CompilerParams(
            dimension_semantics=("parallel",),
            vmem_limit_bytes=vmem_limit,
        ),
    )(x_p, enc_w, dec_w, bias)

    if n_padded != n_samples:
        out = out[:, :n_samples]
    return out


def reference_forward(x, enc_w, enc_b, dec_w, dec_b):
    z = enc_w @ x + enc_b[:, None]
    return dec_w @ z + dec_b[:, None]


if __name__ == "__main__":
    # Small, module-consistent shapes: n_feature genes x n_samples cells,
    # n_latent latent dims.  n_samples deliberately NOT a multiple of 128 to
    # exercise the padding path.
    n_feature = 32
    n_latent = 8
    n_samples = 200

    key = jax.random.PRNGKey(0)
    kx, ke, kd, kbe, kbd = jax.random.split(key, 5)

    x = jax.random.normal(kx, (n_feature, n_samples), dtype=jnp.float32)
    enc_w = jax.random.normal(ke, (n_latent, n_feature), dtype=jnp.float32) * 0.1
    enc_b = jax.random.normal(kbe, (n_latent,), dtype=jnp.float32) * 0.01
    dec_w = jax.random.normal(kd, (n_feature, n_latent), dtype=jnp.float32) * 0.1
    dec_b = jax.random.normal(kbd, (n_feature,), dtype=jnp.float32) * 0.01

    out = autoencoder_forward(x, enc_w, enc_b, dec_w, dec_b)
    out = jax.block_until_ready(out)

    ref = reference_forward(x, enc_w, enc_b, dec_w, dec_b)
    assert out.shape == (n_feature, n_samples)
    assert jnp.allclose(out, ref, atol=1e-4, rtol=1e-4), "mismatch vs reference"

    # TODO(synk): training path (_reduce_dim_ae), orthogonality / spatial
    # losses and AnnData loading are host-side logic, not part of forward().

    print("KERNEL_OK")
</pallas_src>

<mosaic_0001>
module attributes {stable_mosaic.version = 11 : i64} {
  func.func @_ae_forward_kernel(%arg0: i32, %arg1: memref<32x256xf32, #tpu.memory_space<vmem>>, %arg2: memref<8x32xf32, #tpu.memory_space<vmem>>, %arg3: memref<32x8xf32, #tpu.memory_space<vmem>>, %arg4: memref<32x1xf32, #tpu.memory_space<vmem>>, %arg5: memref<32x256xf32, #tpu.memory_space<vmem>>) attributes {dimension_semantics = [#tpu.dimension_semantics<parallel>], iteration_bounds = array<i64: 1>, scalar_prefetch = 0 : i64, scratch_operands = 0 : i64, tpu.core_type = #tpu.core_type<tc>, window_params = [{transform_indices = @transform_0, window_bounds = array<i64: 32, 256>}, {pipeline_mode = #tpu.pipeline_mode<synchronous>, transform_indices = @transform_1, window_bounds = array<i64: 8, 32>}, {pipeline_mode = #tpu.pipeline_mode<synchronous>, transform_indices = @transform_2, window_bounds = array<i64: 32, 8>}, {pipeline_mode = #tpu.pipeline_mode<synchronous>, transform_indices = @transform_3, window_bounds = array<i64: 32, 1>}, {transform_indices = @transform_4, window_bounds = array<i64: 32, 256>}]} {
    %c0 = arith.constant 0 : index
    %c0_0 = arith.constant 0 : index
    %0 = vector.load %arg2[%c0, %c0_0] : memref<8x32xf32, #tpu.memory_space<vmem>>, vector<8x32xf32>
    %c0_1 = arith.constant 0 : index
    %c0_2 = arith.constant 0 : index
    %1 = vector.load %arg1[%c0_1, %c0_2] : memref<32x256xf32, #tpu.memory_space<vmem>>, vector<32x256xf32>
    %cst = arith.constant dense<0.000000e+00> : vector<8x256xf32>
    %2 = tpu.matmul %0, %1, %cst {dimension_numbers = #tpu.dot_dimension_numbers<[1], [0], [0], [1], [0, 0, 1, 1], [], []>} : vector<8x32xf32>, vector<32x256xf32>, vector<8x256xf32> -> vector<8x256xf32>
    %c0_3 = arith.constant 0 : index
    %c0_4 = arith.constant 0 : index
    %3 = vector.load %arg3[%c0_3, %c0_4] : memref<32x8xf32, #tpu.memory_space<vmem>>, vector<32x8xf32>
    %cst_5 = arith.constant dense<0.000000e+00> : vector<32x256xf32>
    %4 = tpu.matmul %3, %2, %cst_5 {dimension_numbers = #tpu.dot_dimension_numbers<[1], [0], [0], [1], [0, 0, 1, 1], [], []>} : vector<32x8xf32>, vector<8x256xf32>, vector<32x256xf32> -> vector<32x256xf32>
    %c0_6 = arith.constant 0 : index
    %c0_7 = arith.constant 0 : index
    %5 = vector.load %arg4[%c0_6, %c0_7] : memref<32x1xf32, #tpu.memory_space<vmem>>, vector<32x1xf32>
    %6 = vector.broadcast %5 : vector<32x1xf32> to vector<32x256xf32>
    %7 = arith.addf %4, %6 : vector<32x256xf32>
    %c0_8 = arith.constant 0 : index
    %c0_9 = arith.constant 0 : index
    %8 = vector.load %arg5[%c0_8, %c0_9] : memref<32x256xf32, #tpu.memory_space<vmem>>, vector<32x256xf32>
    tpu.vector_store %arg5[%c0_8, %c0_9], %7 {strides = array<i32>} : memref<32x256xf32, #tpu.memory_space<vmem>>, vector<32x256xf32>,
    return
  }
  func.func @transform_0(%arg0: i32) -> (i32, i32) {
    %c0_i32 = arith.constant 0 : i32
    %c0_i32_0 = arith.constant 0 : i32
    return %c0_i32, %arg0 : i32, i32
  }
  func.func @transform_1(%arg0: i32) -> (i32, i32) {
    %c0_i32 = arith.constant 0 : i32
    %c0_i32_0 = arith.constant 0 : i32
    %c0_i32_1 = arith.constant 0 : i32
    return %c0_i32, %c0_i32_0 : i32, i32
  }
  func.func @transform_2(%arg0: i32) -> (i32, i32) {
    %c0_i32 = arith.constant 0 : i32
    %c0_i32_0 = arith.constant 0 : i32
    %c0_i32_1 = arith.constant 0 : i32
    return %c0_i32, %c0_i32_0 : i32, i32
  }
  func.func @transform_3(%arg0: i32) -> (i32, i32) {
    %c0_i32 = arith.constant 0 : i32
    %c0_i32_0 = arith.constant 0 : i32
    %c0_i32_1 = arith.constant 0 : i32
    return %c0_i32, %c0_i32_0 : i32, i32
  }
  func.func @transform_4(%arg0: i32) -> (i32, i32) {
    %c0_i32 = arith.constant 0 : i32
    %c0_i32_0 = arith.constant 0 : i32
    return %c0_i32, %arg0 : i32, i32
  }
}

</mosaic_0001>

<llo_original>
// kernel: autoencoder_forward.1
$region0: #{autoencoder_forward.1}
  #allocation0 [shape = 'u32[]', space=smem, size = 0x4, offset = 0x4, fixed_abs, tag = 'smem constant byte address 0x4 - core index']
  #allocation1 [shape = 'u32[144,128]{1,0:T(1,128)}', space=vmem, size = 0x12000, scoped, tag = 'internal scratch']
  %s0 = inlined_call_operand.vmem [shape: f32[32,256], index: 0, kind: input, shape index: {}]
  %s1 = inlined_call_operand.vmem [shape: f32[8,32], index: 1, kind: input, shape index: {}]
  %s2 = inlined_call_operand.vmem [shape: f32[32,8], index: 2, kind: input, shape index: {}]
  %s3 = inlined_call_operand.vmem [shape: f32[32,1], index: 3, kind: input, shape index: {}]
  %s4 = inlined_call_operand.hbm [shape: f32[32,256], index: 4, kind: output, shape index: {}]
  %s5 = sld [smem:[#allocation0]]
  $region26: #{autoencoder_forward.1} parent=0
    _
  %s7 = ssub.s32 1, %s5
  %s8 = scalar_select 0, %s7, %s5
  $region1: #{autoencoder_forward.1} parent=0
    #allocation2 [shape = 'u8[32768]{0}', space=vmem, size = 0x8000, scoped, tag = 'output window, operand 0, single buffered']
    #allocation3 [shape = 's32[1]{0}', space=sflag, size = 0x4, scoped, tag = 'scoped memory for autoencoder_forward.1']
    %9 = vsyncpa [#allocation3], 0
    // Predicated region
    $region2: #{autoencoder_forward.1} parent=1 // pred_check
      _
    $region3: #{autoencoder_forward.1} parent=1 // pred_check_branch
      %11 = sbr.rel (0) target = $region5
    $region4: #{autoencoder_forward.1} parent=1 // pred_region
      _
    $region5: #{autoencoder_forward.1} parent=1 // pred_fallthru
      _
    // Predicated region
    $region6: #{autoencoder_forward.1} parent=1 // pred_check
      _
    $region7: #{autoencoder_forward.1} parent=1 // pred_check_branch
      %13 = sbr.rel (0) target = $region9
    $region8: #{autoencoder_forward.1} parent=1 // pred_region
      _
    $region9: #{autoencoder_forward.1} parent=1 // pred_fallthru
      _
    // Predicated region
    $region10: #{autoencoder_forward.1} parent=1 // pred_check
      _
    $region11: #{autoencoder_forward.1} parent=1 // pred_check_branch
      %15 = sbr.rel (0) target = $region13
    $region12: #{autoencoder_forward.1} parent=1 // pred_region
      _
    $region13: #{autoencoder_forward.1} parent=1 // pred_fallthru
      _
    // Predicated region
    $region14: #{autoencoder_forward.1} parent=1 // pred_check
      _
    $region15: #{autoencoder_forward.1} parent=1 // pred_check_branch
      %17 = sbr.rel (0) target = $region17
    $region16: #{autoencoder_forward.1} parent=1 // pred_region
      _
    $region17: #{autoencoder_forward.1} parent=1 // pred_fallthru
      _
    %v18 = vld [vmem:[%s1] sm:$0xff]
    %v19 = vld [vmem:[%s0] sm:$0xff]
    %v20 = vld [vmem:[%s0 + $0x8] sm:$0xff]
    %v21 = vld [vmem:[%s0 + $0x10] sm:$0xff]
    %v22 = vld [vmem:[%s0 + $0x18] sm:$0xff]
    %v23 = vld [vmem:[%s0 + $0x20] sm:$0xff]
    %v24 = vld [vmem:[%s0 + $0x28] sm:$0xff]
    %v25 = vld [vmem:[%s0 + $0x30] sm:$0xff]
    %v26 = vld [vmem:[%s0 + $0x38] sm:$0xff]
    %vm27 = vcmask 261120
    %v29 = vsel %vm27, %v18, 0
    %31 = vmatprep.subr.mxu0 %v20
    %32 = vmatpush1.msra.mxu0 %v19
    %33 = vmatprep.subr.mxu0 %v22
    %34 = vmatpush1.msra.mxu0 %v21
    %35 = vmatprep.subr.mxu0 %v24
    %36 = vmatpush1.msra.mxu0 %v23
    %37 = vmatprep.subr.mxu0 %v26
    %38 = vmatpush1.msra.mxu0 %v25
    %39 = vmatprep.subr.mxu0 0.0
    %40 = vmatpush1.msra.mxu0 0.0
    %41 = vmatprep.subr.mxu0 0.0
    %42 = vmatpush1.msra.mxu0 0.0
    %43 = vmatprep.subr.mxu0 0.0
    %44 = vmatpush1.msra.mxu0 0.0
    %45 = vmatprep.subr.mxu0 0.0
    %46 = vmatpush1.msra.mxu0 0.0
    %47 = vmatprep.subr.mxu0 0.0
    %48 = vmatpush1.msra.mxu0 0.0
    %49 = vmatprep.subr.mxu0 0.0
    %50 = vmatpush1.msra.mxu0 0.0
    %51 = vmatprep.subr.mxu0 0.0
    %52 = vmatpush1.msra.mxu0 0.0
    %53 = vmatprep.subr.mxu0 0.0
    %54 = vmatpush1.msra.mxu0 0.0
    %55 = vmatprep.subr.mxu0 0.0
    %56 = vmatpush1.msra.mxu0 0.0
    %57 = vmatprep.subr.mxu0 0.0
    %58 = vmatpush1.msra.mxu0 0.0
    %59 = vmatprep.subr.mxu0 0.0
    %60 = vmatpush1.msra.mxu0 0.0
    %61 = vmatprep.subr.mxu0 0.0
    %62 = vmatpush1.msra.mxu0 0.0
    %63 = vmatprep.subr.mxu0 0.0
    %64 = vmatpush1.msra.mxu0 0.0
    %65 = vmatprep.subr.mxu0 0.0
    %66 = vmatpush1.msra.mxu0 0.0
    %67 = vmatprep.subr.mxu0 0.0
    %68 = vmatpush1.msra.mxu0 0.0
    %69 = vmatprep.subr.mxu0 0.0
    %70 = vmatpush1.msra.mxu0 0.0
    %71 = vmatprep.subr.mxu0 0.0
    %72 = vmatpush1.msra.mxu0 0.0
    %73 = vmatprep.subr.mxu0 0.0
    %74 = vmatpush1.msra.mxu0 0.0
    %75 = vmatprep.subr.mxu0 0.0
    %76 = vmatpush1.msra.mxu0 0.0
    %77 = vmatprep.subr.mxu0 0.0
    %78 = vmatpush1.msra.mxu0 0.0
    %79 = vmatprep.subr.mxu0 0.0
    %80 = vmatpush1.msra.mxu0 0.0
    %81 = vmatprep.subr.mxu0 0.0
    %82 = vmatpush1.msra.mxu0 0.0
    %83 = vmatprep.subr.mxu0 0.0
    %84 = vmatpush1.msra.mxu0 0.0
    %85 = vmatprep.subr.mxu0 0.0
    %86 = vmatpush1.msra.mxu0 0.0
    %87 = vmatprep.subr.mxu0 0.0
    %88 = vmatpush1.msra.mxu0 0.0
    %89 = vmatprep.subr.mxu0 0.0
    %90 = vmatpush1.msra.mxu0 0.0
    %91 = vmatprep.subr.mxu0 0.0
    %92 = vmatpush1.msra.mxu0 0.0
    %93 = vmatprep.subr.mxu0 0.0
    %94 = vmatpush1.msra.mxu0 0.0
    %95 = vmatprep.mubr.f32.mxu0 0.0
    %96 = vmatmul.mubr.f32.gmra.mrb[0].mxu0 %v29
    %v97 = vpop.f32.mrb[0].mxu0
    %v98 = vadd.f32 0.0, %v97
    %v99 = vpop.f32.mrb[0].mxu0
    %v100 = vadd.f32 0.0, %v99
    %101 = vdwg.mxu0
    %v102 = vld [vmem:[%s2] sm:$0xff]
    %v103 = vld [vmem:[%s2 + $0x8] sm:$0xff]
    %v104 = vld [vmem:[%s2 + $0x10] sm:$0xff]
    %v105 = vld [vmem:[%s2 + $0x18] sm:$0xff]
    %v106 = vld [vmem:[%s3] sm:$0xff]
    %v107 = vld [vmem:[%s3 + $0x8] sm:$0xff]
    %v108 = vld [vmem:[%s3 + $0x10] sm:$0xff]
    %v109 = vld [vmem:[%s3 + $0x18] sm:$0xff]
    %111 = vset.pattern.permute.xlu0 0
    %112 = vperm.xlu0 %111, %v106
    %v113 = vpop.permute.xlu0 %112
    %116 = vset.pattern.permute.xlu0 0
    %117 = vperm.xlu0 %116, %v107
    %v118 = vpop.permute.xlu0 %117
    %121 = vset.pattern.permute.xlu0 0
    %122 = vperm.xlu0 %121, %v108
    %v123 = vpop.permute.xlu0 %122
    %126 = vset.pattern.permute.xlu0 0
    %127 = vperm.xlu0 %126, %v109
    %v128 = vpop.permute.xlu0 %127
    %vm130 = vcmask 64512
    %v132 = vsel %vm130, %v102, 0
    %v135 = vsel %vm130, %v103, 0
    %v138 = vsel %vm130, %v104, 0
    %v141 = vsel %vm130, %v105, 0
    %143 = vmatprep.subr.mxu0 %v100
    %144 = vmatpush1.msra.mxu0 %v98
    %145 = vmatprep.subr.mxu0 0.0
    %146 = vmatpush1.msra.mxu0 0.0
    %147 = vmatprep.subr.mxu0 0.0
    %148 = vmatpush1.msra.mxu0 0.0
    %149 = vmatprep.subr.mxu0 0.0
    %150 = vmatpush1.msra.mxu0 0.0
    %151 = vmatprep.subr.mxu0 0.0
    %152 = vmatpush1.msra.mxu0 0.0
    %153 = vmatprep.subr.mxu0 0.0
    %154 = vmatpush1.msra.mxu0 0.0
    %155 = vmatprep.subr.mxu0 0.0
    %156 = vmatpush1.msra.mxu0 0.0
    %157 = vmatprep.subr.mxu0 0.0
    %158 = vmatpush1.msra.mxu0 0.0
    %159 = vmatprep.subr.mxu0 0.0
    %160 = vmatpush1.msra.mxu0 0.0
    %161 = vmatprep.subr.mxu0 0.0
    %162 = vmatpush1.msra.mxu0 0.0
    %163 = vmatprep.subr.mxu0 0.0
    %164 = vmatpush1.msra.mxu0 0.0
    %165 = vmatprep.subr.mxu0 0.0
    %166 = vmatpush1.msra.mxu0 0.0
    %167 = vmatprep.subr.mxu0 0.0
    %168 = vmatpush1.msra.mxu0 0.0
    %169 = vmatprep.subr.mxu0 0.0
    %170 = vmatpush1.msra.mxu0 0.0
    %171 = vmatprep.subr.mxu0 0.0
    %172 = vmatpush1.msra.mxu0 0.0
    %173 = vmatprep.subr.mxu0 0.0
    %174 = vmatpush1.msra.mxu0 0.0
    %175 = vmatprep.subr.mxu0 0.0
    %176 = vmatpush1.msra.mxu0 0.0
    %177 = vmatprep.subr.mxu0 0.0
    %178 = vmatpush1.msra.mxu0 0.0
    %179 = vmatprep.subr.mxu0 0.0
    %180 = vmatpush1.msra.mxu0 0.0
    %181 = vmatprep.subr.mxu0 0.0
    %182 = vmatpush1.msra.mxu0 0.0
    %183 = vmatprep.subr.mxu0 0.0
    %184 = vmatpush1.msra.mxu0 0.0
    %185 = vmatprep.subr.mxu0 0.0
    %186 = vmatpush1.msra.mxu0 0.0
    %187 = vmatprep.subr.mxu0 0.0
    %188 = vmatpush1.msra.mxu0 0.0
    %189 = vmatprep.subr.mxu0 0.0
    %190 = vmatpush1.msra.mxu0 0.0
    %191 = vmatprep.subr.mxu0 0.0
    %192 = vmatpush1.msra.mxu0 0.0
    %193 = vmatprep.subr.mxu0 0.0
    %194 = vmatpush1.msra.mxu0 0.0
    %195 = vmatprep.subr.mxu0 0.0
    %196 = vmatpush1.msra.mxu0 0.0
    %197 = vmatprep.subr.mxu0 0.0
    %198 = vmatpush1.msra.mxu0 0.0
    %199 = vmatprep.subr.mxu0 0.0
    %200 = vmatpush1.msra.mxu0 0.0
    %201 = vmatprep.subr.mxu0 0.0
    %202 = vmatpush1.msra.mxu0 0.0
    %203 = vmatprep.subr.mxu0 0.0
    %204 = vmatpush1.msra.mxu0 0.0
    %205 = vmatprep.subr.mxu0 0.0
    %206 = vmatpush1.msra.mxu0 0.0
    %207 = vmatprep.mubr.f32.mxu0 0.0
    %208 = vmatmul.mubr.f32.gmra.mrb[0].mxu0 %v132
    %v209 = vpop.f32.mrb[0].mxu0
    %v210 = vadd.f32 %v113, %v209
    %v211 = vpop.f32.mrb[0].mxu0
    %v212 = vadd.f32 %v113, %v211
    %213 = vmatprep.mubr.f32.mxu0 0.0
    %214 = vmatmul.mubr.f32.gmra.mrb[0].mxu0 %v135
    %v215 = vpop.f32.mrb[0].mxu0
    %v216 = vadd.f32 %v118, %v215
    %v217 = vpop.f32.mrb[0].mxu0
    %v218 = vadd.f32 %v118, %v217
    %219 = vmatprep.mubr.f32.mxu0 0.0
    %220 = vmatmul.mubr.f32.gmra.mrb[0].mxu0 %v138
    %v221 = vpop.f32.mrb[0].mxu0
    %v222 = vadd.f32 %v123, %v221
    %v223 = vpop.f32.mrb[0].mxu0
    %v224 = vadd.f32 %v123, %v223
    %225 = vmatprep.mubr.f32.mxu0 0.0
    %226 = vmatmul.mubr.f32.gmra.mrb[0].mxu0 %v141
    %v227 = vpop.f32.mrb[0].mxu0
    %v228 = vadd.f32 %v128, %v227
    %v229 = vpop.f32.mrb[0].mxu0
    %v230 = vadd.f32 %v128, %v229
    %231 = vdwg.mxu0
    %232 = vst [vmem:[#allocation2] sm:$0xff] %v210
    %233 = vst [vmem:[#allocation2 + $0x8] sm:$0xff] %v212
    %234 = vst [vmem:[#allocation2 + $0x10] sm:$0xff] %v216
    %235 = vst [vmem:[#allocation2 + $0x18] sm:$0xff] %v218
    %236 = vst [vmem:[#allocation2 + $0x20] sm:$0xff] %v222
    %237 = vst [vmem:[#allocation2 + $0x28] sm:$0xff] %v224
    %238 = vst [vmem:[#allocation2 + $0x30] sm:$0xff] %v228
    %239 = vst [vmem:[#allocation2 + $0x38] sm:$0xff] %v230
    // Predicated region
    $region18: #{autoencoder_forward.1} parent=1 // pred_check
      _
    $region19: #{autoencoder_forward.1} parent=1 // pred_check_branch
      %241 = sbr.rel (0) target = $region21
    $region20: #{autoencoder_forward.1} parent=1 // pred_region
      %s243 = ssub.s32 1024, 1024
      %244 = vsyncadd [#allocation3], %s243
      %s245 = sshll.u32 [#allocation2], 4
      %s246 = int_to_ptr.vmem [resolvable:$true] %s245
      %251 = dma.vmem_to_hbm [thread:$0]  %s246, 1024, %s4, [#allocation3], 256, 256, 16
    $region21: #{autoencoder_forward.1} parent=1 // pred_fallthru
      _
    // Predicated region
    $region22: #{autoencoder_forward.1} parent=1 // pred_check
      _
    $region23: #{autoencoder_forward.1} parent=1 // pred_check_branch
      %253 = sbr.rel (0) target = $region25
    $region24: #{autoencoder_forward.1} parent=1 // pred_region
      %254 = dma.done [#allocation3], 1024
    $region25: #{autoencoder_forward.1} parent=1 // pred_fallthru
      _
    %255 = vsyncpa [#allocation3], 1

</llo_original>
